<compile_context>
chip_gen: v7x
topology: tpu7x:2x2x1
jax: 0.10.0
libtpu: 0.0.40
codegen_flags: <defaults>
</compile_context>

<pallas_src>
import functools

import jax
import jax.numpy as jnp
from jax.experimental import pallas as pl
from jax.experimental.pallas import tpu as pltpu


def _round_up(x, m):
    return (x + m - 1) // m * m


# ----------------------------- Pallas kernel ------------------------------ #
def fused_gcn_kernel(a_ref, x_ref, w1_ref, b1_ref, w2_ref, b2_ref, o_ref, h_ref):
    """out = A_hat @ relu(A_hat @ (X W1) + b1) @ W2 + b2, fully fused."""
    a = a_ref[...]  # bf16 normalized adjacency, loaded once, reused by both layers

    # ---- layer 1: feature transform (MXU) + aggregation (MXU) + bias + ReLU ----
    xw1 = jnp.dot(x_ref[...], w1_ref[...], preferred_element_type=jnp.float32)
    h = jnp.dot(a, xw1.astype(jnp.bfloat16), preferred_element_type=jnp.float32)
    h = jnp.maximum(h + b1_ref[...], 0.0)

    # Hidden activations stay resident in VMEM scratch (no HBM round trip).
    h_ref[...] = h.astype(jnp.bfloat16)

    # ---- layer 2: transform + aggregation + bias (no ReLU) ----
    hw2 = jnp.dot(h_ref[...], w2_ref[...], preferred_element_type=jnp.float32)
    out = jnp.dot(a, hw2.astype(jnp.bfloat16), preferred_element_type=jnp.float32)
    o_ref[...] = (out + b2_ref[...]).astype(o_ref.dtype)


# ------------------------------ wrapper ------------------------------------ #
@jax.jit
def gcn_forward_fused(a_hat, x, w1, b1, w2, b2):
    """Fused 2-layer GCN forward. a_hat is precomputed (hoisted) outside."""
    n, f = x.shape
    h = w1.shape[1]
    o = w2.shape[1]

    # Pad node dim for bf16 sublane packing; feature dims to lane-dense 128.
    n_p = _round_up(n, 16)
    f_p = _round_up(f, 128)
    h_p = _round_up(h, 128)
    o_p = _round_up(o, 128)

    a_p = jnp.zeros((n_p, n_p), jnp.bfloat16).at[:n, :n].set(a_hat.astype(jnp.bfloat16))
    x_p = jnp.zeros((n_p, f_p), jnp.bfloat16).at[:n, :f].set(x.astype(jnp.bfloat16))
    w1_p = jnp.zeros((f_p, h_p), jnp.bfloat16).at[:f, :h].set(w1.astype(jnp.bfloat16))
    w2_p = jnp.zeros((h_p, o_p), jnp.bfloat16).at[:h, :o].set(w2.astype(jnp.bfloat16))
    b1_p = jnp.zeros((1, h_p), jnp.float32).at[0, :h].set(b1)
    b2_p = jnp.zeros((1, o_p), jnp.float32).at[0, :o].set(b2)

    out_p = pl.pallas_call(
        fused_gcn_kernel,
        out_shape=jax.ShapeDtypeStruct((n_p, o_p), jnp.float32),
        # Small problem: single grid point, full arrays resident in VMEM.
        in_specs=[
            pl.BlockSpec((n_p, n_p), lambda: (0, 0)),   # A_hat (bf16)
            pl.BlockSpec((n_p, f_p), lambda: (0, 0)),   # X     (bf16)
            pl.BlockSpec((f_p, h_p), lambda: (0, 0)),   # W1    (bf16)
            pl.BlockSpec((1, h_p), lambda: (0, 0)),     # b1    (f32, lane-dense)
            pl.BlockSpec((h_p, o_p), lambda: (0, 0)),   # W2    (bf16)
            pl.BlockSpec((1, o_p), lambda: (0, 0)),     # b2    (f32, lane-dense)
        ],
        out_specs=pl.BlockSpec((n_p, o_p), lambda: (0, 0)),
        scratch_shapes=[pltpu.VMEM((n_p, h_p), jnp.bfloat16)],  # hidden activations
    )(a_p, x_p, w1_p, b1_p, w2_p, b2_p)

    return out_p[:n, :o]


# ------------------------------ glue (JAX) -------------------------------- #
def build_norm_adj(edge_index, num_nodes):
    """Dense A_hat = D^{-1/2}(A + I)D^{-1/2}, PyG gcn_norm semantics.

    Hoisted out of the forward path: compute once per graph and reuse.
    """
    src = edge_index[0]
    dst = edge_index[1]
    a = jnp.zeros((num_nodes, num_nodes), jnp.float32)
    # A[dst, src] accumulates messages flowing src -> dst.
    a = a.at[dst, src].add(1.0)
    # add_remaining_self_loops: only add a self loop where one is not present.
    diag = jnp.diagonal(a)
    a = a + jnp.diag(jnp.where(diag == 0.0, 1.0, 0.0))
    # Degree over incoming edges (+ self loop), matching gcn_norm with the
    # default flow='source_to_target'.
    deg = jnp.sum(a, axis=1)
    dinv = jnp.where(deg > 0, jax.lax.rsqrt(deg), 0.0)
    return dinv[:, None] * a * dinv[None, :]


def glorot(key, fan_in, fan_out):
    limit = jnp.sqrt(6.0 / (fan_in + fan_out))
    return jax.random.uniform(
        key, (fan_in, fan_out), jnp.float32, minval=-limit, maxval=limit
    )


def gcn_model_forward(x, a_hat, params):
    return gcn_forward_fused(
        a_hat, x, params["w1"], params["b1"], params["w2"], params["b2"]
    )


# --------------------------------- main ------------------------------------ #
if __name__ == "__main__":
    num_nodes = 16
    input_dim = 8      # stands in for preprocessed_features.shape[1]
    hidden_dim = 64
    output_dim = 4

    key = jax.random.PRNGKey(0)
    kx, k1, k2 = jax.random.split(key, 3)

    # Deterministic node features.
    x = jax.random.normal(kx, (num_nodes, input_dim), jnp.float32)

    # Deterministic undirected ring graph: edges i <-> (i+1) mod N.
    srcs = jnp.arange(num_nodes, dtype=jnp.int32)
    dsts = (srcs + 1) % num_nodes
    edge_index = jnp.stack(
        [jnp.concatenate([srcs, dsts]), jnp.concatenate([dsts, srcs])], axis=0
    )  # [2, 2N]

    # Parameters: Glorot-uniform weights, zero biases (GCNConv defaults).
    params = {
        "w1": glorot(k1, input_dim, hidden_dim),
        "b1": jnp.zeros((hidden_dim,), jnp.float32),
        "w2": glorot(k2, hidden_dim, output_dim),
        "b2": jnp.zeros((output_dim,), jnp.float32),
    }

    # A_hat is built once (hoisted out of the forward / Pallas hot path).
    a_hat = jax.block_until_ready(build_norm_adj(edge_index, num_nodes))

    out = gcn_model_forward(x, a_hat, params)
    out = jax.block_until_ready(out)
    assert out.shape == (num_nodes, output_dim)
    assert jnp.all(jnp.isfinite(out))
    print("KERNEL_OK")
</pallas_src>

<mosaic_0001>
module attributes {stable_mosaic.version = 11 : i64} {
  func.func @fused_gcn_kernel(%arg0: memref<16x16xbf16, #tpu.memory_space<vmem>>, %arg1: memref<16x128xbf16, #tpu.memory_space<vmem>>, %arg2: memref<128x128xbf16, #tpu.memory_space<vmem>>, %arg3: memref<1x128xf32, #tpu.memory_space<vmem>>, %arg4: memref<128x128xbf16, #tpu.memory_space<vmem>>, %arg5: memref<1x128xf32, #tpu.memory_space<vmem>>, %arg6: memref<16x128xf32, #tpu.memory_space<vmem>>, %arg7: memref<16x128xbf16, #tpu.memory_space<vmem>>) attributes {dimension_semantics = [], scalar_prefetch = 0 : i64, scratch_operands = 1 : i64, tpu.core_type = #tpu.core_type<tc>} {
    %c0 = arith.constant 0 : index
    %c0_0 = arith.constant 0 : index
    %0 = vector.load %arg0[%c0, %c0_0] : memref<16x16xbf16, #tpu.memory_space<vmem>>, vector<16x16xbf16>
    %c0_1 = arith.constant 0 : index
    %c0_2 = arith.constant 0 : index
    %1 = vector.load %arg1[%c0_1, %c0_2] : memref<16x128xbf16, #tpu.memory_space<vmem>>, vector<16x128xbf16>
    %c0_3 = arith.constant 0 : index
    %c0_4 = arith.constant 0 : index
    %2 = vector.load %arg2[%c0_3, %c0_4] : memref<128x128xbf16, #tpu.memory_space<vmem>>, vector<128x128xbf16>
    %cst = arith.constant dense<0.000000e+00> : vector<16x128xf32>
    %3 = tpu.matmul %1, %2, %cst {dimension_numbers = #tpu.dot_dimension_numbers<[1], [0], [0], [1], [0, 0, 1, 1], [], []>} : vector<16x128xbf16>, vector<128x128xbf16>, vector<16x128xf32> -> vector<16x128xf32>
    %4 = arith.truncf %3 : vector<16x128xf32> to vector<16x128xbf16>
    %cst_5 = arith.constant dense<0.000000e+00> : vector<16x128xf32>
    %5 = tpu.matmul %0, %4, %cst_5 {dimension_numbers = #tpu.dot_dimension_numbers<[1], [0], [0], [1], [0, 0, 1, 1], [], []>} : vector<16x16xbf16>, vector<16x128xbf16>, vector<16x128xf32> -> vector<16x128xf32>
    %c0_6 = arith.constant 0 : index
    %c0_7 = arith.constant 0 : index
    %6 = vector.load %arg3[%c0_6, %c0_7] : memref<1x128xf32, #tpu.memory_space<vmem>>, vector<1x128xf32>
    %7 = vector.broadcast %6 : vector<1x128xf32> to vector<16x128xf32>
    %8 = arith.addf %5, %7 : vector<16x128xf32>
    %cst_8 = arith.constant 0.000000e+00 : f32
    %9 = vector.broadcast %cst_8 : f32 to vector<16x128xf32>
    %10 = arith.maximumf %8, %9 : vector<16x128xf32>
    %11 = arith.truncf %10 : vector<16x128xf32> to vector<16x128xbf16>
    %c0_9 = arith.constant 0 : index
    %c0_10 = arith.constant 0 : index
    %12 = vector.load %arg7[%c0_9, %c0_10] : memref<16x128xbf16, #tpu.memory_space<vmem>>, vector<16x128xbf16>
    tpu.vector_store %arg7[%c0_9, %c0_10], %11 {strides = array<i32>} : memref<16x128xbf16, #tpu.memory_space<vmem>>, vector<16x128xbf16>,
    %c0_11 = arith.constant 0 : index
    %c0_12 = arith.constant 0 : index
    %13 = vector.load %arg7[%c0_11, %c0_12] : memref<16x128xbf16, #tpu.memory_space<vmem>>, vector<16x128xbf16>
    %c0_13 = arith.constant 0 : index
    %c0_14 = arith.constant 0 : index
    %14 = vector.load %arg4[%c0_13, %c0_14] : memref<128x128xbf16, #tpu.memory_space<vmem>>, vector<128x128xbf16>
    %cst_15 = arith.constant dense<0.000000e+00> : vector<16x128xf32>
    %15 = tpu.matmul %13, %14, %cst_15 {dimension_numbers = #tpu.dot_dimension_numbers<[1], [0], [0], [1], [0, 0, 1, 1], [], []>} : vector<16x128xbf16>, vector<128x128xbf16>, vector<16x128xf32> -> vector<16x128xf32>
    %16 = arith.truncf %15 : vector<16x128xf32> to vector<16x128xbf16>
    %cst_16 = arith.constant dense<0.000000e+00> : vector<16x128xf32>
    %17 = tpu.matmul %0, %16, %cst_16 {dimension_numbers = #tpu.dot_dimension_numbers<[1], [0], [0], [1], [0, 0, 1, 1], [], []>} : vector<16x16xbf16>, vector<16x128xbf16>, vector<16x128xf32> -> vector<16x128xf32>
    %c0_17 = arith.constant 0 : index
    %c0_18 = arith.constant 0 : index
    %18 = vector.load %arg5[%c0_17, %c0_18] : memref<1x128xf32, #tpu.memory_space<vmem>>, vector<1x128xf32>
    %19 = vector.broadcast %18 : vector<1x128xf32> to vector<16x128xf32>
    %20 = arith.addf %17, %19 : vector<16x128xf32>
    %c0_19 = arith.constant 0 : index
    %c0_20 = arith.constant 0 : index
    %21 = vector.load %arg6[%c0_19, %c0_20] : memref<16x128xf32, #tpu.memory_space<vmem>>, vector<16x128xf32>
    tpu.vector_store %arg6[%c0_19, %c0_20], %20 {strides = array<i32>} : memref<16x128xf32, #tpu.memory_space<vmem>>, vector<16x128xf32>,
    return
  }
}

</mosaic_0001>

<llo_original>
// kernel: gcn_forward_fused.1
$region0: #{gcn_forward_fused.1}
  #allocation0 [shape = 'u32[]', space=smem, size = 0x4, offset = 0x4, fixed_abs, tag = 'smem constant byte address 0x4 - core index']
  #allocation1 [shape = 'u32[144,128]{1,0:T(1,128)}', space=vmem, size = 0x12000, scoped, tag = 'internal scratch']
  #allocation2 [shape = 'bf16[16,128]{1,0:T(16,128)(2,1)}', space=vmem, size = 0x1000, scoped, tag = 'scratch operand']
  %s0 = inlined_call_operand.vmem [shape: bf16[16,16], index: 0, kind: input, shape index: {}]
  %s1 = inlined_call_operand.vmem [shape: bf16[16,128], index: 1, kind: input, shape index: {}]
  %s2 = inlined_call_operand.vmem [shape: bf16[128,128], index: 2, kind: input, shape index: {}]
  %s3 = inlined_call_operand.vmem [shape: f32[1,128], index: 3, kind: input, shape index: {}]
  %s4 = inlined_call_operand.vmem [shape: bf16[128,128], index: 4, kind: input, shape index: {}]
  %s5 = inlined_call_operand.vmem [shape: f32[1,128], index: 5, kind: input, shape index: {}]
  %s6 = inlined_call_operand.vmem [shape: f32[16,128], index: 6, kind: output, shape index: {}]
  %s7 = sld [smem:[#allocation0]]
  $region34: #{gcn_forward_fused.1} parent=0
    _
  %s9 = ssub.s32 1, %s7
  %s10 = scalar_select 0, %s9, %s7
  // Predicated region
  $region2: #{gcn_forward_fused.1} parent=0 // pred_check
    _
  $region3: #{gcn_forward_fused.1} parent=0 // pred_check_branch
    %12 = sbr.rel (0) target = $region5
  $region4: #{gcn_forward_fused.1} parent=0 // pred_region
    _
  $region5: #{gcn_forward_fused.1} parent=0 // pred_fallthru
    _
  // Predicated region
  $region6: #{gcn_forward_fused.1} parent=0 // pred_check
    _
  $region7: #{gcn_forward_fused.1} parent=0 // pred_check_branch
    %14 = sbr.rel (0) target = $region9
  $region8: #{gcn_forward_fused.1} parent=0 // pred_region
    _
  $region9: #{gcn_forward_fused.1} parent=0 // pred_fallthru
    _
  // Predicated region
  $region10: #{gcn_forward_fused.1} parent=0 // pred_check
    _
  $region11: #{gcn_forward_fused.1} parent=0 // pred_check_branch
    %16 = sbr.rel (0) target = $region13
  $region12: #{gcn_forward_fused.1} parent=0 // pred_region
    _
  $region13: #{gcn_forward_fused.1} parent=0 // pred_fallthru
    _
  // Predicated region
  $region14: #{gcn_forward_fused.1} parent=0 // pred_check
    _
  $region15: #{gcn_forward_fused.1} parent=0 // pred_check_branch
    %18 = sbr.rel (0) target = $region17
  $region16: #{gcn_forward_fused.1} parent=0 // pred_region
    _
  $region17: #{gcn_forward_fused.1} parent=0 // pred_fallthru
    _
  // Predicated region
  $region18: #{gcn_forward_fused.1} parent=0 // pred_check
    _
  $region19: #{gcn_forward_fused.1} parent=0 // pred_check_branch
    %20 = sbr.rel (0) target = $region21
  $region20: #{gcn_forward_fused.1} parent=0 // pred_region
    _
  $region21: #{gcn_forward_fused.1} parent=0 // pred_fallthru
    _
  // Predicated region
  $region22: #{gcn_forward_fused.1} parent=0 // pred_check
    _
  $region23: #{gcn_forward_fused.1} parent=0 // pred_check_branch
    %22 = sbr.rel (0) target = $region25
  $region24: #{gcn_forward_fused.1} parent=0 // pred_region
    _
  $region25: #{gcn_forward_fused.1} parent=0 // pred_fallthru
    _
  %v24 = vld [vmem:[%s0] sm:$0xf]
  %v25 = vld [vmem:[%s0 + $0x4] sm:$0xf]
  %v26 = vld [vmem:[%s1] sm:$0xf]
  %v27 = vld [vmem:[%s1 + $0x4] sm:$0xf]
  %v28 = vld [vmem:[%s2] sm:$0xf]
  %v29 = vld [vmem:[%s2 + $0x4] sm:$0xf]
  %v30 = vld [vmem:[%s2 + $0x8] sm:$0xf]
  %v31 = vld [vmem:[%s2 + $0xc] sm:$0xf]
  %v32 = vld [vmem:[%s2 + $0x10] sm:$0xf]
  %v33 = vld [vmem:[%s2 + $0x14] sm:$0xf]
  %v34 = vld [vmem:[%s2 + $0x18] sm:$0xf]
  %v35 = vld [vmem:[%s2 + $0x1c] sm:$0xf]
  %v36 = vld [vmem:[%s2 + $0x20] sm:$0xf]
  %v37 = vld [vmem:[%s2 + $0x24] sm:$0xf]
  %v38 = vld [vmem:[%s2 + $0x28] sm:$0xf]
  %v39 = vld [vmem:[%s2 + $0x2c] sm:$0xf]
  %v40 = vld [vmem:[%s2 + $0x30] sm:$0xf]
  %v41 = vld [vmem:[%s2 + $0x34] sm:$0xf]
  %v42 = vld [vmem:[%s2 + $0x38] sm:$0xf]
  %v43 = vld [vmem:[%s2 + $0x3c] sm:$0xf]
  %v46 = vunpack.c.l.b16 %v26
  %v47 = vunpack.c.l.b16 %v27
  %v48 = vpack.c.b16 %v47, %v46
  %v66 = vunpack.c.l.b16 %v28
  %v67 = vunpack.c.l.b16 %v29
  %v68 = vunpack.c.l.b16 %v30
  %v69 = vunpack.c.l.b16 %v31
  %v70 = vunpack.c.l.b16 %v32
  %v71 = vunpack.c.l.b16 %v33
  %v72 = vunpack.c.l.b16 %v34
  %v73 = vunpack.c.l.b16 %v35
  %v74 = vunpack.c.l.b16 %v36
  %v75 = vunpack.c.l.b16 %v37
  %v76 = vunpack.c.l.b16 %v38
  %v77 = vunpack.c.l.b16 %v39
  %v78 = vunpack.c.l.b16 %v40
  %v79 = vunpack.c.l.b16 %v41
  %v80 = vunpack.c.l.b16 %v42
  %v81 = vunpack.c.l.b16 %v43
  %v82 = vpack.c.b16 %v67, %v66
  %v83 = vpack.c.b16 %v69, %v68
  %v84 = vpack.c.b16 %v71, %v70
  %v85 = vpack.c.b16 %v73, %v72
  %v86 = vpack.c.b16 %v75, %v74
  %v87 = vpack.c.b16 %v77, %v76
  %v88 = vpack.c.b16 %v79, %v78
  %v89 = vpack.c.b16 %v81, %v80
  %98 = vmatprep.subr.bf16.mxu0 0
  %99 = vmatpush1.bf16.msra.mxu0 %v82
  %100 = vmatprep.subr.bf16.mxu0 0
  %101 = vmatpush1.bf16.msra.mxu0 %v83
  %102 = vmatprep.subr.bf16.mxu0 0
  %103 = vmatpush1.bf16.msra.mxu0 %v84
  %104 = vmatprep.subr.bf16.mxu0 0
  %105 = vmatpush1.bf16.msra.mxu0 %v85
  %106 = vmatprep.subr.bf16.mxu0 0
  %107 = vmatpush1.bf16.msra.mxu0 %v86
  %108 = vmatprep.subr.bf16.mxu0 0
  %109 = vmatpush1.bf16.msra.mxu0 %v87
  %110 = vmatprep.subr.bf16.mxu0 0
  %111 = vmatpush1.bf16.msra.mxu0 %v88
  %112 = vmatprep.subr.bf16.mxu0 0
  %113 = vmatpush1.bf16.msra.mxu0 %v89
  %114 = vmatprep.subr.bf16.mxu0 0
  %115 = vmatpush1.bf16.msra.mxu0 0
  %116 = vmatprep.subr.bf16.mxu0 0
  %117 = vmatpush1.bf16.msra.mxu0 0
  %118 = vmatprep.subr.bf16.mxu0 0
  %119 = vmatpush1.bf16.msra.mxu0 0
  %120 = vmatprep.subr.bf16.mxu0 0
  %121 = vmatpush1.bf16.msra.mxu0 0
  %122 = vmatprep.subr.bf16.mxu0 0
  %123 = vmatpush1.bf16.msra.mxu0 0
  %124 = vmatprep.subr.bf16.mxu0 0
  %125 = vmatpush1.bf16.msra.mxu0 0
  %126 = vmatprep.subr.bf16.mxu0 0
  %127 = vmatpush1.bf16.msra.mxu0 0
  %128 = vmatprep.subr.bf16.mxu0 0
  %129 = vmatpush1.bf16.msra.mxu0 0
  %130 = vmatprep.mubr.bf16.mxu0 0
  %131 = vmatmul.mubr.bf16.gmra.mrb[0].mxu0 %v48
  %v132 = vpop.f32.mrb[0].mxu0
  %v133 = vadd.f32 0.0, %v132
  %v134 = vpop.f32.mrb[0].mxu0
  %v135 = vpop.f32.mrb[0].mxu0
  %v136 = vadd.f32 0.0, %v135
  %v137 = vpop.f32.mrb[0].mxu0
  %138 = vdwg.mxu0
  %v139 = vpack.c.bf16 %v136, %v133
  %v140 = vld [vmem:[%s3] sm:$0x1]
  %v142 = vlaneseq
  %v143 = vshrl.u32 %v142, 7
  %v144 = vsub.s32 0, %v143
  %v145 = vrot.slane %v140, %v144
  %v149 = vunpack.c.l.b16 %v24
  %v150 = vunpack.c.l.b16 %v25
  %v151 = vpack.c.b16 %v150, %v149
  %vm152 = vcmask 130048
  %v154 = vsel %vm152, %v151, 0
  %156 = vmatprep.subr.bf16.mxu0 0
  %157 = vmatpush1.bf16.msra.mxu0 %v139
  %158 = vmatprep.subr.bf16.mxu0 0
  %159 = vmatpush1.bf16.msra.mxu0 0
  %160 = vmatprep.subr.bf16.mxu0 0
  %161 = vmatpush1.bf16.msra.mxu0 0
  %162 = vmatprep.subr.bf16.mxu0 0
  %163 = vmatpush1.bf16.msra.mxu0 0
  %164 = vmatprep.subr.bf16.mxu0 0
  %165 = vmatpush1.bf16.msra.mxu0 0
  %166 = vmatprep.subr.bf16.mxu0 0
  %167 = vmatpush1.bf16.msra.mxu0 0
  %168 = vmatprep.subr.bf16.mxu0 0
  %169 = vmatpush1.bf16.msra.mxu0 0
  %170 = vmatprep.subr.bf16.mxu0 0
  %171 = vmatpush1.bf16.msra.mxu0 0
  %172 = vmatprep.subr.bf16.mxu0 0
  %173 = vmatpush1.bf16.msra.mxu0 0
  %174 = vmatprep.subr.bf16.mxu0 0
  %175 = vmatpush1.bf16.msra.mxu0 0
  %176 = vmatprep.subr.bf16.mxu0 0
  %177 = vmatpush1.bf16.msra.mxu0 0
  %178 = vmatprep.subr.bf16.mxu0 0
  %179 = vmatpush1.bf16.msra.mxu0 0
  %180 = vmatprep.subr.bf16.mxu0 0
  %181 = vmatpush1.bf16.msra.mxu0 0
  %182 = vmatprep.subr.bf16.mxu0 0
  %183 = vmatpush1.bf16.msra.mxu0 0
  %184 = vmatprep.subr.bf16.mxu0 0
  %185 = vmatpush1.bf16.msra.mxu0 0
  %186 = vmatprep.subr.bf16.mxu0 0
  %187 = vmatpush1.bf16.msra.mxu0 0
  %188 = vmatprep.mubr.bf16.mxu0 0
  %189 = vmatmul.mubr.bf16.gmra.mrb[0].mxu0 %v154
  %v190 = vpop.f32.mrb[0].mxu0
  %v191 = vadd.f32 %v145, %v190
  %v192 = vpop.f32.mrb[0].mxu0
  %v193 = vpop.f32.mrb[0].mxu0
  %v194 = vadd.f32 %v145, %v193
  %v195 = vpop.f32.mrb[0].mxu0
  %196 = vdwg.mxu0
  %v197 = vmax.f32 %v191, 0.0
  %v198 = vmax.f32 %v194, 0.0
  %v199 = vpack.c.bf16 %v198, %v197
  %200 = vst [vmem:[#allocation2] sm:$0xff] %v199
  %v201 = vld [vmem:[#allocation2] sm:$0xff]
  %v202 = vld [vmem:[%s4] sm:$0xf]
  %v203 = vld [vmem:[%s4 + $0x4] sm:$0xf]
  %v204 = vld [vmem:[%s4 + $0x8] sm:$0xf]
  %v205 = vld [vmem:[%s4 + $0xc] sm:$0xf]
  %v206 = vld [vmem:[%s4 + $0x10] sm:$0xf]
  %v207 = vld [vmem:[%s4 + $0x14] sm:$0xf]
  %v208 = vld [vmem:[%s4 + $0x18] sm:$0xf]
  %v209 = vld [vmem:[%s4 + $0x1c] sm:$0xf]
  %v210 = vld [vmem:[%s4 + $0x20] sm:$0xf]
  %v211 = vld [vmem:[%s4 + $0x24] sm:$0xf]
  %v212 = vld [vmem:[%s4 + $0x28] sm:$0xf]
  %v213 = vld [vmem:[%s4 + $0x2c] sm:$0xf]
  %v214 = vld [vmem:[%s4 + $0x30] sm:$0xf]
  %v215 = vld [vmem:[%s4 + $0x34] sm:$0xf]
  %v216 = vld [vmem:[%s4 + $0x38] sm:$0xf]
  %v217 = vld [vmem:[%s4 + $0x3c] sm:$0xf]
  %v234 = vunpack.c.l.b16 %v202
  %v235 = vunpack.c.l.b16 %v203
  %v236 = vunpack.c.l.b16 %v204
  %v237 = vunpack.c.l.b16 %v205
  %v238 = vunpack.c.l.b16 %v206
  %v239 = vunpack.c.l.b16 %v207
  %v240 = vunpack.c.l.b16 %v208
  %v241 = vunpack.c.l.b16 %v209
  %v242 = vunpack.c.l.b16 %v210
  %v243 = vunpack.c.l.b16 %v211
  %v244 = vunpack.c.l.b16 %v212
  %v245 = vunpack.c.l.b16 %v213
  %v246 = vunpack.c.l.b16 %v214
  %v247 = vunpack.c.l.b16 %v215
  %v248 = vunpack.c.l.b16 %v216
  %v249 = vunpack.c.l.b16 %v217
  %v250 = vpack.c.b16 %v235, %v234
  %v251 = vpack.c.b16 %v237, %v236
  %v252 = vpack.c.b16 %v239, %v238
  %v253 = vpack.c.b16 %v241, %v240
  %v254 = vpack.c.b16 %v243, %v242
  %v255 = vpack.c.b16 %v245, %v244
  %v256 = vpack.c.b16 %v247, %v246
  %v257 = vpack.c.b16 %v249, %v248
  %266 = vmatprep.subr.bf16.mxu0 0
  %267 = vmatpush1.bf16.msra.mxu0 %v250
  %268 = vmatprep.subr.bf16.mxu0 0
  %269 = vmatpush1.bf16.msra.mxu0 %v251
  %270 = vmatprep.subr.bf16.mxu0 0
  %271 = vmatpush1.bf16.msra.mxu0 %v252
  %272 = vmatprep.subr.bf16.mxu0 0
  %273 = vmatpush1.bf16.msra.mxu0 %v253
  %274 = vmatprep.subr.bf16.mxu0 0
  %275 = vmatpush1.bf16.msra.mxu0 %v254
  %276 = vmatprep.subr.bf16.mxu0 0
  %277 = vmatpush1.bf16.msra.mxu0 %v255
  %278 = vmatprep.subr.bf16.mxu0 0
  %279 = vmatpush1.bf16.msra.mxu0 %v256
  %280 = vmatprep.subr.bf16.mxu0 0
  %281 = vmatpush1.bf16.msra.mxu0 %v257
  %282 = vmatprep.subr.bf16.mxu0 0
  %283 = vmatpush1.bf16.msra.mxu0 0
  %284 = vmatprep.subr.bf16.mxu0 0
  %285 = vmatpush1.bf16.msra.mxu0 0
  %286 = vmatprep.subr.bf16.mxu0 0
  %287 = vmatpush1.bf16.msra.mxu0 0
  %288 = vmatprep.subr.bf16.mxu0 0
  %289 = vmatpush1.bf16.msra.mxu0 0
  %290 = vmatprep.subr.bf16.mxu0 0
  %291 = vmatpush1.bf16.msra.mxu0 0
  %292 = vmatprep.subr.bf16.mxu0 0
  %293 = vmatpush1.bf16.msra.mxu0 0
  %294 = vmatprep.subr.bf16.mxu0 0
  %295 = vmatpush1.bf16.msra.mxu0 0
  %296 = vmatprep.subr.bf16.mxu0 0
  %297 = vmatpush1.bf16.msra.mxu0 0
  %298 = vmatprep.mubr.bf16.mxu0 0
  %299 = vmatmul.mubr.bf16.gmra.mrb[0].mxu0 %v201
  %v300 = vpop.f32.mrb[0].mxu0
  %v301 = vadd.f32 0.0, %v300
  %v302 = vpop.f32.mrb[0].mxu0
  %v303 = vpop.f32.mrb[0].mxu0
  %v304 = vadd.f32 0.0, %v303
  %v305 = vpop.f32.mrb[0].mxu0
  %306 = vdwg.mxu0
  %v307 = vpack.c.bf16 %v304, %v301
  %v308 = vld [vmem:[%s5] sm:$0x1]
  %v310 = vlaneseq
  %v311 = vshrl.u32 %v310, 7
  %v312 = vsub.s32 0, %v311
  %v313 = vrot.slane %v308, %v312
  %315 = vmatprep.subr.bf16.mxu0 0
  %316 = vmatpush1.bf16.msra.mxu0 %v307
  %317 = vmatprep.subr.bf16.mxu0 0
  %318 = vmatpush1.bf16.msra.mxu0 0
  %319 = vmatprep.subr.bf16.mxu0 0
  %320 = vmatpush1.bf16.msra.mxu0 0
  %321 = vmatprep.subr.bf16.mxu0 0
  %322 = vmatpush1.bf16.msra.mxu0 0
  %323 = vmatprep.subr.bf16.mxu0 0
  %324 = vmatpush1.bf16.msra.mxu0 0
  %325 = vmatprep.subr.bf16.mxu0 0
  %326 = vmatpush1.bf16.msra.mxu0 0
  %327 = vmatprep.subr.bf16.mxu0 0
  %328 = vmatpush1.bf16.msra.mxu0 0
  %329 = vmatprep.subr.bf16.mxu0 0
  %330 = vmatpush1.bf16.msra.mxu0 0
  %331 = vmatprep.subr.bf16.mxu0 0
  %332 = vmatpush1.bf16.msra.mxu0 0
  %333 = vmatprep.subr.bf16.mxu0 0
  %334 = vmatpush1.bf16.msra.mxu0 0
  %335 = vmatprep.subr.bf16.mxu0 0
  %336 = vmatpush1.bf16.msra.mxu0 0
  %337 = vmatprep.subr.bf16.mxu0 0
  %338 = vmatpush1.bf16.msra.mxu0 0
  %339 = vmatprep.subr.bf16.mxu0 0
  %340 = vmatpush1.bf16.msra.mxu0 0
  %341 = vmatprep.subr.bf16.mxu0 0
  %342 = vmatpush1.bf16.msra.mxu0 0
  %343 = vmatprep.subr.bf16.mxu0 0
  %344 = vmatpush1.bf16.msra.mxu0 0
  %345 = vmatprep.subr.bf16.mxu0 0
  %346 = vmatpush1.bf16.msra.mxu0 0
  %347 = vmatprep.mubr.bf16.mxu0 0
  %348 = vmatmul.mubr.bf16.gmra.mrb[0].mxu0 %v154
  %v349 = vpop.f32.mrb[0].mxu0
  %v350 = vadd.f32 %v313, %v349
  %v351 = vpop.f32.mrb[0].mxu0
  %v352 = vpop.f32.mrb[0].mxu0
  %v353 = vadd.f32 %v313, %v352
  %v354 = vpop.f32.mrb[0].mxu0
  %355 = vdwg.mxu0
  %356 = vst [vmem:[%s6] sm:$0xff] %v350
  %357 = vst [vmem:[%s6 + $0x8] sm:$0xff] %v353
  // Predicated region
  $region26: #{gcn_forward_fused.1} parent=0 // pred_check
    _
  $region27: #{gcn_forward_fused.1} parent=0 // pred_check_branch
    %359 = sbr.rel (0) target = $region29
  $region28: #{gcn_forward_fused.1} parent=0 // pred_region
    _
  $region29: #{gcn_forward_fused.1} parent=0 // pred_fallthru
    _
  // Predicated region
  $region30: #{gcn_forward_fused.1} parent=0 // pred_check
    _
  $region31: #{gcn_forward_fused.1} parent=0 // pred_check_branch
    %361 = sbr.rel (0) target = $region33
  $region32: #{gcn_forward_fused.1} parent=0 // pred_region
    _
  $region33: #{gcn_forward_fused.1} parent=0 // pred_fallthru
    _

</llo_original>
